<compile_context>
chip_gen: v5e
topology: v5e:2x2
jax: 0.10.0
libtpu: 0.0.40
codegen_flags: <defaults>
</compile_context>

<pallas_src>
import functools

import jax
import jax.numpy as jnp
from jax.experimental import pallas as pl
from jax.experimental.pallas import tpu as pltpu

_LANE = 128
_SUBLANE = 8


def _round_up(x, m):
    return (x + m - 1) // m * m


def _lsce_kernel(logits_ref, target_ref, loss_ref, *, n_valid, n_classes, eps, tm):
    """Per-row label-smoothing CE contributions for one [tm, C] row tile."""
    i = pl.program_id(0)
    x = logits_ref[...].astype(jnp.float32)                # [tm, C]
    rows, cols = x.shape

    # Numerically stable logsumexp along the class (lane) axis.
    m = jnp.max(x, axis=-1, keepdims=True)                 # [tm, 1]
    s = jnp.sum(jnp.exp(x - m), axis=-1, keepdims=True)    # [tm, 1]
    logz = m + jnp.log(s)                                  # [tm, 1]
    sum_x = jnp.sum(x, axis=-1, keepdims=True)             # [tm, 1]

    # x at the target class via one-hot compare + select (no gather).
    tgt = target_ref[...]                                  # [tm, 1] int32
    col = jax.lax.broadcasted_iota(jnp.int32, (rows, cols), 1)
    x_tgt = jnp.sum(jnp.where(col == tgt, x, 0.0), axis=-1, keepdims=True)

    smooth_row = jnp.float32(n_classes) * logz - sum_x     # = -sum_j log p_j
    nll_row = logz - x_tgt                                 # = -log p_target
    loss_row = (jnp.float32(eps / n_classes) * smooth_row
                + jnp.float32(1.0 - eps) * nll_row)        # [tm, 1]

    # Mask rows past the true batch size (ragged last tile may hold garbage;
    # the select keeps any NaN/inf in those rows from contaminating the sum).
    row_idx = jax.lax.broadcasted_iota(jnp.int32, (rows, 1), 0) + i * tm
    loss_row = jnp.where(row_idx < n_valid, loss_row, 0.0)

    loss_ref[...] = loss_row[None]                         # [1, tm, 1]


def label_smoothing_cross_entropy(logits, target, *, eps=0.1, reduction='mean',
                                  max_rows_per_tile=None):
    """Pallas TPU equivalent of LabelSmoothingCrossEntropy.forward(output, target).

    logits: [N, C] float, target: [N] int.  Returns a scalar loss.
    """
    if reduction not in ('mean', 'sum'):
        # TODO(synk): reduction='none' (per-sample loss vector output) not implemented.
        raise NotImplementedError(f"reduction={reduction!r}")

    N, C = logits.shape
    itemsize = jnp.dtype(logits.dtype).itemsize

    # Per-row VMEM bytes of ONE pipeline buffer across all blocked operands,
    # accounting for lane padding to 128:
    #   [tm, C] logits, [tm, 1] int32 target, [tm, 1] f32 per-row loss output.
    bytes_per_row = _round_up(C, _LANE) * itemsize + _LANE * 4 + _LANE * 4
    budget = 6 * 1024 * 1024   # per buffer set; >1 MiB blocks reach ~85%+ of HBM roofline
    tm = max(_SUBLANE, (budget // bytes_per_row) // _SUBLANE * _SUBLANE)
    if max_rows_per_tile is not None:                      # testing hook (forces multi-tile grids)
        tm = min(tm, max(_SUBLANE, _round_up(max_rows_per_tile, _SUBLANE)))
    tm = min(tm, _round_up(N, _SUBLANE))
    grid = pl.cdiv(N, tm)

    # BlockSpec double-buffers every operand; leave headroom, cap at the
    # smallest physical VMEM across generations (v7x: 64 MiB per TC).
    needed = 2 * tm * bytes_per_row
    vmem_limit = int(min(max(needed + (4 << 20), 32 << 20), 64 << 20))
    # TODO(synk): vocab-scale C (a single row set of tiles > VMEM) would need a
    # class-dim grid axis with an online logsumexp; not implemented here.

    target_2d = target.astype(jnp.int32).reshape(N, 1)

    per_row = pl.pallas_call(
        functools.partial(_lsce_kernel, n_valid=N, n_classes=C, eps=eps, tm=tm),
        out_shape=jax.ShapeDtypeStruct((grid, tm, 1), jnp.float32),
        grid=(grid,),
        in_specs=[
            pl.BlockSpec((tm, C), lambda i: (i, 0)),   # class dim kept whole (lane-dense)
            pl.BlockSpec((tm, 1), lambda i: (i, 0)),   # per-row target id
        ],
        out_specs=pl.BlockSpec((1, tm, 1), lambda i: (i, 0, 0)),
        compiler_params=pltpu.CompilerParams(
            dimension_semantics=("parallel",),          # row chunks are independent
            vmem_limit_bytes=vmem_limit),
    )(logits, target_2d)

    total = jnp.sum(per_row)
    if reduction == 'mean':
        total = total / N
    return total


def _reference(logits, target, eps=0.1, reduction='mean'):
    """Pure-JAX reference matching the PyTorch module."""
    c = logits.shape[-1]
    logp = jax.nn.log_softmax(logits.astype(jnp.float32), axis=-1)
    picked = jnp.take_along_axis(logp, target[:, None].astype(jnp.int32), axis=-1)
    if reduction == 'sum':
        loss = -jnp.sum(logp)
        nll = -jnp.sum(picked)
    else:
        loss = jnp.mean(-jnp.sum(logp, axis=-1))
        nll = jnp.mean(-picked)
    return loss * eps / c + (1 - eps) * nll


if __name__ == "__main__":
    key = jax.random.PRNGKey(0)
    k_logits, k_target = jax.random.split(key)

    # Small shapes consistent with the module: [batch, classes] logits + [batch] labels.
    N, C = 8, 32
    logits = jax.random.normal(k_logits, (N, C), jnp.float32) * 2.0
    target = jax.random.randint(k_target, (N,), 0, C, jnp.int32)

    loss = label_smoothing_cross_entropy(logits, target, eps=0.1, reduction='mean')
    loss = jax.block_until_ready(loss)
    ref = _reference(logits, target, eps=0.1, reduction='mean')
    assert loss.shape == ()
    assert bool(jnp.isfinite(loss))
    assert abs(float(loss) - float(ref)) <= 1e-4 * max(1.0, abs(float(ref))), \
        (float(loss), float(ref))

    # 'sum' reduction with a batch that is not a multiple of 8 (single ragged tile).
    N2 = 5
    logits2 = jax.random.normal(k_logits, (N2, C), jnp.float32)
    target2 = jax.random.randint(k_target, (N2,), 0, C, jnp.int32)
    loss2 = jax.block_until_ready(
        label_smoothing_cross_entropy(logits2, target2, eps=0.1, reduction='sum'))
    ref2 = _reference(logits2, target2, eps=0.1, reduction='sum')
    assert abs(float(loss2) - float(ref2)) <= 1e-4 * max(1.0, abs(float(ref2))), \
        (float(loss2), float(ref2))

    # Multi-step grid with a ragged last tile (tm forced to 8 -> grid=3 for N=20).
    N3 = 20
    logits3 = jax.random.normal(k_logits, (N3, C), jnp.float32)
    target3 = jax.random.randint(k_target, (N3,), 0, C, jnp.int32)
    loss3 = jax.block_until_ready(
        label_smoothing_cross_entropy(logits3, target3, eps=0.1, reduction='mean',
                                      max_rows_per_tile=8))
    ref3 = _reference(logits3, target3, eps=0.1, reduction='mean')
    assert abs(float(loss3) - float(ref3)) <= 1e-4 * max(1.0, abs(float(ref3))), \
        (float(loss3), float(ref3))

    print("KERNEL_OK")
</pallas_src>

<mosaic_0001>
module attributes {stable_mosaic.version = 11 : i64} {
  func.func @_lsce_kernel(%arg0: i32, %arg1: memref<8x32xf32, #tpu.memory_space<vmem>>, %arg2: memref<8x1xi32, #tpu.memory_space<vmem>>, %arg3: memref<1x8x1xf32, #tpu.memory_space<vmem>>) attributes {dimension_semantics = [#tpu.dimension_semantics<parallel>], iteration_bounds = array<i64: 1>, scalar_prefetch = 0 : i64, scratch_operands = 0 : i64, tpu.core_type = #tpu.core_type<tc>, window_params = [{transform_indices = @transform_0, window_bounds = array<i64: 8, 32>}, {transform_indices = @transform_1, window_bounds = array<i64: 8, 1>}, {transform_indices = @transform_2, window_bounds = array<i64: 1, 8, 1>}]} {
    %c0 = arith.constant 0 : index
    %c0_0 = arith.constant 0 : index
    %0 = vector.load %arg1[%c0, %c0_0] : memref<8x32xf32, #tpu.memory_space<vmem>>, vector<8x32xf32>
    %cst = arith.constant dense<0xFF800000> : vector<8xf32>
    %1 = vector.multi_reduction <maximumf>, %0, %cst [1] : vector<8x32xf32> to vector<8xf32>
    %2 = vector.shape_cast %1 : vector<8xf32> to vector<8x1xf32>
    %3 = vector.broadcast %2 : vector<8x1xf32> to vector<8x32xf32>
    %4 = arith.subf %0, %3 : vector<8x32xf32>
    %5 = math.exp %4 : vector<8x32xf32>
    %cst_1 = arith.constant dense<0.000000e+00> : vector<8xf32>
    %6 = vector.multi_reduction <add>, %5, %cst_1 [1] : vector<8x32xf32> to vector<8xf32>
    %7 = vector.shape_cast %6 : vector<8xf32> to vector<8x1xf32>
    %8 = math.log %7 : vector<8x1xf32>
    %9 = arith.addf %2, %8 : vector<8x1xf32>
    %cst_2 = arith.constant dense<0.000000e+00> : vector<8xf32>
    %10 = vector.multi_reduction <add>, %0, %cst_2 [1] : vector<8x32xf32> to vector<8xf32>
    %11 = vector.shape_cast %10 : vector<8xf32> to vector<8x1xf32>
    %c0_3 = arith.constant 0 : index
    %c0_4 = arith.constant 0 : index
    %12 = vector.load %arg2[%c0_3, %c0_4] : memref<8x1xi32, #tpu.memory_space<vmem>>, vector<8x1xi32>
    %13 = tpu.iota {dimensions = array<i32: 1>} : vector<8x32xi32>
    %14 = vector.broadcast %12 : vector<8x1xi32> to vector<8x32xi32>
    %15 = arith.cmpi eq, %13, %14 : vector<8x32xi32>
    %cst_5 = arith.constant 0.000000e+00 : f32
    %16 = vector.broadcast %cst_5 : f32 to vector<8x32xf32>
    %17 = arith.select %15, %0, %16 : vector<8x32xi1>, vector<8x32xf32>
    %cst_6 = arith.constant dense<0.000000e+00> : vector<8xf32>
    %18 = vector.multi_reduction <add>, %17, %cst_6 [1] : vector<8x32xf32> to vector<8xf32>
    %19 = vector.shape_cast %18 : vector<8xf32> to vector<8x1xf32>
    %cst_7 = arith.constant 3.200000e+01 : f32
    %20 = vector.broadcast %cst_7 : f32 to vector<8x1xf32>
    %21 = arith.mulf %20, %9 : vector<8x1xf32>
    %22 = arith.subf %21, %11 : vector<8x1xf32>
    %23 = arith.subf %9, %19 : vector<8x1xf32>
    %cst_8 = arith.constant 3.125000e-03 : f32
    %24 = vector.broadcast %cst_8 : f32 to vector<8x1xf32>
    %25 = arith.mulf %24, %22 : vector<8x1xf32>
    %cst_9 = arith.constant 0.899999976 : f32
    %26 = vector.broadcast %cst_9 : f32 to vector<8x1xf32>
    %27 = arith.mulf %26, %23 : vector<8x1xf32>
    %28 = arith.addf %25, %27 : vector<8x1xf32>
    %29 = tpu.iota {dimensions = array<i32: 0>} : vector<8x1xi32>
    %c8_i32 = arith.constant 8 : i32
    %30 = arith.muli %arg0, %c8_i32 : i32
    %31 = vector.broadcast %30 : i32 to vector<8x1xi32>
    %32 = arith.addi %29, %31 : vector<8x1xi32>
    %c8_i32_10 = arith.constant 8 : i32
    %33 = vector.broadcast %c8_i32_10 : i32 to vector<8x1xi32>
    %34 = arith.cmpi slt, %32, %33 : vector<8x1xi32>
    %cst_11 = arith.constant 0.000000e+00 : f32
    %35 = vector.broadcast %cst_11 : f32 to vector<8x1xf32>
    %36 = arith.select %34, %28, %35 : vector<8x1xi1>, vector<8x1xf32>
    %37 = vector.shape_cast %36 : vector<8x1xf32> to vector<1x8x1xf32>
    %c0_12 = arith.constant 0 : index
    %c0_13 = arith.constant 0 : index
    %c0_14 = arith.constant 0 : index
    %38 = vector.load %arg3[%c0_12, %c0_13, %c0_14] : memref<1x8x1xf32, #tpu.memory_space<vmem>>, vector<1x8x1xf32>
    tpu.vector_store %arg3[%c0_12, %c0_13, %c0_14], %37 {strides = array<i32>} : memref<1x8x1xf32, #tpu.memory_space<vmem>>, vector<1x8x1xf32>,
    return
  }
  func.func @transform_0(%arg0: i32) -> (i32, i32) {
    %c0_i32 = arith.constant 0 : i32
    %c0_i32_0 = arith.constant 0 : i32
    return %arg0, %c0_i32 : i32, i32
  }
  func.func @transform_1(%arg0: i32) -> (i32, i32) {
    %c0_i32 = arith.constant 0 : i32
    %c0_i32_0 = arith.constant 0 : i32
    return %arg0, %c0_i32 : i32, i32
  }
  func.func @transform_2(%arg0: i32) -> (i32, i32, i32) {
    %c0_i32 = arith.constant 0 : i32
    %c0_i32_0 = arith.constant 0 : i32
    %c0_i32_1 = arith.constant 0 : i32
    return %arg0, %c0_i32, %c0_i32_0 : i32, i32, i32
  }
}

</mosaic_0001>

<llo_original>
// kernel: tpu_custom_call.1
$region0: #{tpu_custom_call.1}
  #allocation0 [shape = 'u32[]', space=smem, size = 0x4, offset = 0x4, fixed_abs, tag = 'smem constant byte address 0x4 - core index']
  #allocation1 [shape = 'u32[72,128]{1,0:T(1,128)}', space=vmem, size = 0x9000, scoped, tag = 'internal scratch']
  %s0 = inlined_call_operand.vmem [shape: f32[8,32], index: 0, kind: input, shape index: {}]
  %s1 = inlined_call_operand.vmem [shape: s32[8,1], index: 1, kind: input, shape index: {}]
  %s2 = inlined_call_operand.vmem [shape: f32[1,8,1], index: 2, kind: output, shape index: {}]
  %s3 = sld [smem:[#allocation0]]
  $region18: #{tpu_custom_call.1} parent=0
    _
  %s5 = ssub.s32 1, %s3
  %s6 = scalar_select 0, %s5, %s3
  // Predicated region
  $region2: #{tpu_custom_call.1} parent=0 // pred_check
    _
  $region3: #{tpu_custom_call.1} parent=0 // pred_check_branch
    %8 = sbr.rel (0) target = $region5
  $region4: #{tpu_custom_call.1} parent=0 // pred_region
    _
  $region5: #{tpu_custom_call.1} parent=0 // pred_fallthru
    _
  // Predicated region
  $region6: #{tpu_custom_call.1} parent=0 // pred_check
    _
  $region7: #{tpu_custom_call.1} parent=0 // pred_check_branch
    %10 = sbr.rel (0) target = $region9
  $region8: #{tpu_custom_call.1} parent=0 // pred_region
    _
  $region9: #{tpu_custom_call.1} parent=0 // pred_fallthru
    _
  %v11 = vld [vmem:[%s0] sm:$0xff]
  %vm12 = vcmask 261120
  %v13 = vsel %vm12, %v11, -inf
  %14 = vmax.xlane.f32.xlu0 %v13
  %v15 = vpop.xlane.xlu0 %14
  %v16 = vsub.f32 %v11, %v15
  %v17 = vmul.f32 %v16, 1.442695
  %v18 = vpow.pop %v17
  %v19 = vsel %vm12, %v18, 0.0
  %20 = vadd.xlane.f32.xlu0 %v19
  %v21 = vpop.xlane.xlu0 %20
  %v22 = vlog2.pop %v21
  %v23 = vmul.f32 %v22, 0.6931472
  %v24 = vadd.f32 %v15, %v23
  %v25 = vsel %vm12, %v11, 0.0
  %26 = vadd.xlane.f32.xlu0 %v25
  %v27 = vpop.xlane.xlu0 %26
  %v28 = vld [vmem:[%s1] sm:$0xff]
  %v29 = vlaneseq
  %v30 = vand.u32 %v29, 127
  %31 = vset.pattern.permute.xlu0 0
  %32 = vperm.xlu0 %31, %v28
  %v33 = vpop.permute.xlu0 %32
  %vm34 = vcmp.eq.s32.totalorder %v30, %v33
  %v35 = vsel %vm34, %v11, 0.0
  %v36 = vsel %vm12, %v35, 0.0
  %37 = vadd.xlane.f32.xlu0 %v36
  %v38 = vpop.xlane.xlu0 %37
  %v39 = vmul.f32 %v24, 32.0
  %v40 = vsub.f32 %v39, %v27
  %v41 = vsub.f32 %v24, %v38
  %v42 = vmul.f32 %v40, 0.003125
  %v43 = vmul.f32 %v41, 0.9
  %v44 = vadd.f32 %v42, %v43
  %v45 = vlaneseq
  %v46 = vshrl.u32 %v45, 7
  %s47 = smul.u32 0, 8
  %v48 = vstv %s47
  %v49 = vadd.s32 %v46, %v48
  %vm50 = vcmp.lt.s32.totalorder %v49, 8
  %v51 = vsel %vm50, %v44, 0.0
  %vm52 = vcmask 7168
  %53 = vst.msk [vmem:[%s2] sm:$0xff] %vm52, %v51
  // Predicated region
  $region10: #{tpu_custom_call.1} parent=0 // pred_check
    _
  $region11: #{tpu_custom_call.1} parent=0 // pred_check_branch
    %55 = sbr.rel (0) target = $region13
  $region12: #{tpu_custom_call.1} parent=0 // pred_region
    _
  $region13: #{tpu_custom_call.1} parent=0 // pred_fallthru
    _
  // Predicated region
  $region14: #{tpu_custom_call.1} parent=0 // pred_check
    _
  $region15: #{tpu_custom_call.1} parent=0 // pred_check_branch
    %57 = sbr.rel (0) target = $region17
  $region16: #{tpu_custom_call.1} parent=0 // pred_region
    _
  $region17: #{tpu_custom_call.1} parent=0 // pred_fallthru
    _

</llo_original>
